<compile_context>
chip_gen: v5e
topology: v5e:2x2
jax: 0.10.0
libtpu: 0.0.40
codegen_flags: <defaults>
</compile_context>

<pallas_src>
import functools

import jax
import jax.numpy as jnp
from jax.experimental import pallas as pl
from jax.experimental.pallas import tpu as pltpu

_LANE = 128


def _make_divisible(v, divisor, min_value=None):
    if min_value is None:
        min_value = divisor
    new_v = max(min_value, int(v + divisor / 2) // divisor * divisor)
    if new_v < 0.9 * v:
        new_v += divisor
    return new_v


# ----------------------------------------------------------------------------- kernel
def _se_kernel(x_ref, w1t_ref, b1_ref, w2t_ref, b2_ref, o_ref, *, inv_hw):
    # x_ref: (Bt, C, HWp) tile, lane-dense last axis.
    x = x_ref[...]

    # AdaptiveAvgPool2d(1): mean over the flattened spatial axis, f32 accumulation.
    # (Zero pad columns contribute 0 to the sum; inv_hw uses the true HW.)
    s = jnp.sum(x.astype(jnp.float32), axis=-1) * inv_hw          # (Bt, C)

    # conv_reduce (1x1 conv == matmul) + bias, ReLU.   w1t: (C, Cr_pad)
    r = jnp.dot(s, w1t_ref[...], preferred_element_type=jnp.float32) + b1_ref[...]
    r = jnp.maximum(r, 0.0)                                       # (Bt, Cr_pad)

    # conv_expand (1x1 conv == matmul) + bias.         w2t: (Cr_pad, C)
    e = jnp.dot(r, w2t_ref[...], preferred_element_type=jnp.float32) + b2_ref[...]

    # hard_sigmoid gate: relu6(e + 3) / 6
    gate = jnp.clip(e + 3.0, 0.0, 6.0) * (1.0 / 6.0)              # (Bt, C)

    # Broadcast multiply in the input dtype (no second full-tile f32 copy).
    o_ref[...] = (x * gate.astype(x.dtype)[:, :, None]).astype(o_ref.dtype)


# ----------------------------------------------------------------------------- planning
def _vmem_plan():
    """Return (tile_byte_budget, vmem_limit_cap) for this TPU generation."""
    try:
        cap = int(pltpu.get_tpu_info().vmem_capacity_bytes)
    except Exception:
        cap = 64 << 20                      # conservative fallback (v7x-class)
    if cap <= (64 << 20):                   # v7x: 64 MiB physical per TensorCore
        return (6 << 20), (44 << 20)
    return (8 << 20), (96 << 20)            # v5e / v6e: 128 MiB physical


def _pick_block_b(B, C, HWp, itemsize, tile_budget):
    """Largest batch-tile under the per-tile byte budget; keep the grid >= 2."""
    per_sample = C * HWp * itemsize
    bt = max(1, tile_budget // per_sample)  # >=1 even if one sample exceeds budget
    bt = min(bt, B)
    if B >= 2:
        bt = min(bt, -(-B // 2))            # grid >= 2 so v7x's 2nd TC is not idle
    return int(bt)


# ----------------------------------------------------------------------------- wrappers
def prepare_se_params(w_reduce, b_reduce, w_expand, b_expand, weight_dtype=jnp.float32):
    """One-time parameter prep (do at load time, NOT per forward call):
    transpose 1x1-conv weights to matmul layout and zero-pad Cr to a lane multiple.
    Padding is numerically inert: ReLU(0)=0 and the padded w2t rows are zero."""
    Cr, C = w_reduce.shape
    Cr_pad = ((Cr + _LANE - 1) // _LANE) * _LANE
    w1t = jnp.zeros((C, Cr_pad), weight_dtype).at[:, :Cr].set(
        jnp.transpose(w_reduce).astype(weight_dtype))
    b1 = jnp.zeros((1, Cr_pad), jnp.float32).at[:, :Cr].set(
        b_reduce.astype(jnp.float32))
    w2t = jnp.zeros((Cr_pad, C), weight_dtype).at[:Cr, :].set(
        jnp.transpose(w_expand).astype(weight_dtype))
    b2 = b_expand.reshape(1, C).astype(jnp.float32)
    return w1t, b1, w2t, b2


def squeeze_excite_prepared(x, w1t, b1, w2t, b2):
    """x: (B, C, H, W).  Prepared params from prepare_se_params()."""
    B, C, H, W = x.shape
    HW = H * W
    HWp = ((HW + _LANE - 1) // _LANE) * _LANE
    itemsize = jnp.dtype(x.dtype).itemsize
    Cr_pad = w1t.shape[1]

    # Lane-dense view of the activations (free reshape: last dims are contiguous).
    x2 = x.reshape(B, C, HW)
    if HWp != HW:
        # TODO(synk): replace the wrapper zero-pad with in-kernel lane repacking
        # (fold channels per 128-lane row) to avoid one extra HBM pass on 7x7 maps.
        x2 = jnp.pad(x2, ((0, 0), (0, 0), (0, HWp - HW)))

    # Per-generation tile budget + explicit scoped-VMEM limit.
    tile_budget, vmem_cap = _vmem_plan()
    Bt = _pick_block_b(B, C, HWp, itemsize, tile_budget)
    grid = (pl.cdiv(B, Bt),)

    tile_bytes = Bt * C * HWp * itemsize
    weight_bytes = (w1t.size * jnp.dtype(w1t.dtype).itemsize
                    + w2t.size * jnp.dtype(w2t.dtype).itemsize
                    + (b1.size + b2.size) * 4)
    # 4x tile (in + out, each double-buffered) + 2x weights + headroom.
    vmem_limit = int(min(max(4 * tile_bytes + 2 * weight_bytes + (4 << 20), 32 << 20),
                         vmem_cap))

    kernel = functools.partial(_se_kernel, inv_hw=1.0 / float(HW))

    cost = pl.CostEstimate(
        flops=4 * B * C * Cr_pad + 3 * B * C * HWp,
        transcendentals=0,
        bytes_accessed=2 * B * C * HWp * itemsize + weight_bytes,
    )

    out2 = pl.pallas_call(
        kernel,
        out_shape=jax.ShapeDtypeStruct((B, C, HWp), x.dtype),
        grid_spec=pltpu.PrefetchScalarGridSpec(
            num_scalar_prefetch=0,
            grid=grid,
            in_specs=[
                pl.BlockSpec((Bt, C, HWp), lambda b: (b, 0, 0)),
                pl.BlockSpec((C, Cr_pad), lambda b: (0, 0)),
                pl.BlockSpec((1, Cr_pad), lambda b: (0, 0)),
                pl.BlockSpec((Cr_pad, C), lambda b: (0, 0)),
                pl.BlockSpec((1, C), lambda b: (0, 0)),
            ],
            out_specs=pl.BlockSpec((Bt, C, HWp), lambda b: (b, 0, 0)),
        ),
        compiler_params=pltpu.CompilerParams(
            dimension_semantics=("parallel",),
            vmem_limit_bytes=vmem_limit,
        ),
        cost_estimate=cost,
    )(x2, w1t, b1, w2t, b2)

    if HWp != HW:
        out2 = out2[:, :, :HW]
    return out2.reshape(B, C, H, W)


def squeeze_excite(x, w_reduce, b_reduce, w_expand, b_expand):
    """Convenience wrapper: prep + run.  Prefer preparing params once and calling
    squeeze_excite_prepared directly inside a model."""
    params = prepare_se_params(w_reduce, b_reduce, w_expand, b_expand,
                               weight_dtype=x.dtype)
    return squeeze_excite_prepared(x, *params)


def reference_se(x, w_reduce, b_reduce, w_expand, b_expand):
    """Plain-JAX reference matching the PyTorch forward exactly."""
    s = jnp.mean(x, axis=(2, 3))                                   # (B, C)
    r = jnp.maximum(s @ w_reduce.T + b_reduce, 0.0)                # (B, Cr)
    e = r @ w_expand.T + b_expand                                  # (B, C)
    gate = jnp.clip(e + 3.0, 0.0, 6.0) / 6.0
    return x * gate[:, :, None, None]


if __name__ == "__main__":
    key = jax.random.PRNGKey(0)

    # Small shapes consistent with the module's forward.
    B, C, H, W = 2, 16, 16, 16
    se_ratio = 0.25
    divisor = 4
    Cr = _make_divisible(C * se_ratio, divisor)   # -> 4

    k0, k1, k2, k3, k4 = jax.random.split(key, 5)
    x = jax.random.normal(k0, (B, C, H, W), dtype=jnp.float32)

    # Deterministic parameter init (1x1 conv weights flattened to matrices).
    w_reduce = 0.1 * jax.random.normal(k1, (Cr, C), dtype=jnp.float32)
    b_reduce = 0.05 * jax.random.normal(k2, (Cr,), dtype=jnp.float32)
    w_expand = 0.1 * jax.random.normal(k3, (C, Cr), dtype=jnp.float32)
    b_expand = 0.05 * jax.random.normal(k4, (C,), dtype=jnp.float32)

    # Prepare weights once (load-time), then run the kernel.
    w1t, b1, w2t, b2 = prepare_se_params(w_reduce, b_reduce, w_expand, b_expand,
                                         weight_dtype=x.dtype)
    out = squeeze_excite_prepared(x, w1t, b1, w2t, b2)
    out = jax.block_until_ready(out)

    ref = reference_se(x, w_reduce, b_reduce, w_expand, b_expand)
    assert out.shape == (B, C, H, W)
    assert jnp.allclose(out, ref, atol=1e-5, rtol=1e-5), "mismatch vs reference"

    print("KERNEL_OK")
</pallas_src>

<mosaic_0001>
module attributes {stable_mosaic.version = 11 : i64} {
  func.func @_se_kernel(%arg0: i32, %arg1: memref<1x16x256xf32, #tpu.memory_space<vmem>>, %arg2: memref<16x128xf32, #tpu.memory_space<vmem>>, %arg3: memref<1x128xf32, #tpu.memory_space<vmem>>, %arg4: memref<128x16xf32, #tpu.memory_space<vmem>>, %arg5: memref<1x16xf32, #tpu.memory_space<vmem>>, %arg6: memref<1x16x256xf32, #tpu.memory_space<vmem>>) attributes {dimension_semantics = [#tpu.dimension_semantics<parallel>], iteration_bounds = array<i64: 2>, scalar_prefetch = 0 : i64, scratch_operands = 0 : i64, tpu.core_type = #tpu.core_type<tc>, window_params = [{transform_indices = @transform_0, window_bounds = array<i64: 1, 16, 256>}, {pipeline_mode = #tpu.pipeline_mode<synchronous>, transform_indices = @transform_1, window_bounds = array<i64: 16, 128>}, {pipeline_mode = #tpu.pipeline_mode<synchronous>, transform_indices = @transform_2, window_bounds = array<i64: 1, 128>}, {pipeline_mode = #tpu.pipeline_mode<synchronous>, transform_indices = @transform_3, window_bounds = array<i64: 128, 16>}, {pipeline_mode = #tpu.pipeline_mode<synchronous>, transform_indices = @transform_4, window_bounds = array<i64: 1, 16>}, {transform_indices = @transform_5, window_bounds = array<i64: 1, 16, 256>}]} {
    %c0 = arith.constant 0 : index
    %c0_0 = arith.constant 0 : index
    %c0_1 = arith.constant 0 : index
    %0 = vector.load %arg1[%c0, %c0_0, %c0_1] : memref<1x16x256xf32, #tpu.memory_space<vmem>>, vector<1x16x256xf32>
    %cst = arith.constant dense<0.000000e+00> : vector<1x16xf32>
    %1 = vector.multi_reduction <add>, %0, %cst [2] : vector<1x16x256xf32> to vector<1x16xf32>
    %cst_2 = arith.constant 3.906250e-03 : f32
    %2 = vector.broadcast %cst_2 : f32 to vector<1x16xf32>
    %3 = arith.mulf %1, %2 : vector<1x16xf32>
    %c0_3 = arith.constant 0 : index
    %c0_4 = arith.constant 0 : index
    %4 = vector.load %arg2[%c0_3, %c0_4] : memref<16x128xf32, #tpu.memory_space<vmem>>, vector<16x128xf32>
    %cst_5 = arith.constant dense<0.000000e+00> : vector<1x128xf32>
    %5 = tpu.matmul %3, %4, %cst_5 {dimension_numbers = #tpu.dot_dimension_numbers<[1], [0], [0], [1], [0, 0, 1, 1], [], []>} : vector<1x16xf32>, vector<16x128xf32>, vector<1x128xf32> -> vector<1x128xf32>
    %c0_6 = arith.constant 0 : index
    %c0_7 = arith.constant 0 : index
    %6 = vector.load %arg3[%c0_6, %c0_7] : memref<1x128xf32, #tpu.memory_space<vmem>>, vector<1x128xf32>
    %7 = arith.addf %5, %6 : vector<1x128xf32>
    %cst_8 = arith.constant 0.000000e+00 : f32
    %8 = vector.broadcast %cst_8 : f32 to vector<1x128xf32>
    %9 = arith.maximumf %7, %8 : vector<1x128xf32>
    %c0_9 = arith.constant 0 : index
    %c0_10 = arith.constant 0 : index
    %10 = vector.load %arg4[%c0_9, %c0_10] : memref<128x16xf32, #tpu.memory_space<vmem>>, vector<128x16xf32>
    %cst_11 = arith.constant dense<0.000000e+00> : vector<1x16xf32>
    %11 = tpu.matmul %9, %10, %cst_11 {dimension_numbers = #tpu.dot_dimension_numbers<[1], [0], [0], [1], [0, 0, 1, 1], [], []>} : vector<1x128xf32>, vector<128x16xf32>, vector<1x16xf32> -> vector<1x16xf32>
    %c0_12 = arith.constant 0 : index
    %c0_13 = arith.constant 0 : index
    %12 = vector.load %arg5[%c0_12, %c0_13] : memref<1x16xf32, #tpu.memory_space<vmem>>, vector<1x16xf32>
    %13 = arith.addf %11, %12 : vector<1x16xf32>
    %cst_14 = arith.constant 3.000000e+00 : f32
    %14 = vector.broadcast %cst_14 : f32 to vector<1x16xf32>
    %15 = arith.addf %13, %14 : vector<1x16xf32>
    %cst_15 = arith.constant 0.000000e+00 : f32
    %cst_16 = arith.constant 6.000000e+00 : f32
    %16 = vector.broadcast %cst_15 : f32 to vector<1x16xf32>
    %17 = arith.maximumf %16, %15 : vector<1x16xf32>
    %18 = vector.broadcast %cst_16 : f32 to vector<1x16xf32>
    %19 = arith.minimumf %18, %17 : vector<1x16xf32>
    %cst_17 = arith.constant 0.166666672 : f32
    %20 = vector.broadcast %cst_17 : f32 to vector<1x16xf32>
    %21 = arith.mulf %19, %20 : vector<1x16xf32>
    %22 = vector.shape_cast %21 : vector<1x16xf32> to vector<1x16x1xf32>
    %23 = vector.broadcast %22 : vector<1x16x1xf32> to vector<1x16x256xf32>
    %24 = arith.mulf %0, %23 : vector<1x16x256xf32>
    %c0_18 = arith.constant 0 : index
    %c0_19 = arith.constant 0 : index
    %c0_20 = arith.constant 0 : index
    %25 = vector.load %arg6[%c0_18, %c0_19, %c0_20] : memref<1x16x256xf32, #tpu.memory_space<vmem>>, vector<1x16x256xf32>
    tpu.vector_store %arg6[%c0_18, %c0_19, %c0_20], %24 {strides = array<i32>} : memref<1x16x256xf32, #tpu.memory_space<vmem>>, vector<1x16x256xf32>,
    return
  }
  func.func @transform_0(%arg0: i32) -> (i32, i32, i32) {
    %c0_i32 = arith.constant 0 : i32
    %c0_i32_0 = arith.constant 0 : i32
    %c0_i32_1 = arith.constant 0 : i32
    return %arg0, %c0_i32, %c0_i32_0 : i32, i32, i32
  }
  func.func @transform_1(%arg0: i32) -> (i32, i32) {
    %c0_i32 = arith.constant 0 : i32
    %c0_i32_0 = arith.constant 0 : i32
    %c0_i32_1 = arith.constant 0 : i32
    return %c0_i32, %c0_i32_0 : i32, i32
  }
  func.func @transform_2(%arg0: i32) -> (i32, i32) {
    %c0_i32 = arith.constant 0 : i32
    %c0_i32_0 = arith.constant 0 : i32
    %c0_i32_1 = arith.constant 0 : i32
    return %c0_i32, %c0_i32_0 : i32, i32
  }
  func.func @transform_3(%arg0: i32) -> (i32, i32) {
    %c0_i32 = arith.constant 0 : i32
    %c0_i32_0 = arith.constant 0 : i32
    %c0_i32_1 = arith.constant 0 : i32
    return %c0_i32, %c0_i32_0 : i32, i32
  }
  func.func @transform_4(%arg0: i32) -> (i32, i32) {
    %c0_i32 = arith.constant 0 : i32
    %c0_i32_0 = arith.constant 0 : i32
    %c0_i32_1 = arith.constant 0 : i32
    return %c0_i32, %c0_i32_0 : i32, i32
  }
  func.func @transform_5(%arg0: i32) -> (i32, i32, i32) {
    %c0_i32 = arith.constant 0 : i32
    %c0_i32_0 = arith.constant 0 : i32
    %c0_i32_1 = arith.constant 0 : i32
    return %arg0, %c0_i32, %c0_i32_0 : i32, i32, i32
  }
}

</mosaic_0001>

<llo_original>
// kernel: tpu_custom_call.1
$region0: #{tpu_custom_call.1}
  #allocation0 [shape = 'u32[]', space=smem, size = 0x4, offset = 0x4, fixed_abs, tag = 'smem constant byte address 0x4 - core index']
  #allocation1 [shape = 'u32[72,128]{1,0:T(1,128)}', space=vmem, size = 0x9000, scoped, tag = 'internal scratch']
  %s0 = inlined_call_operand.vmem [shape: f32[2,16,256], index: 0, kind: input, shape index: {}]
  %s1 = inlined_call_operand.vmem [shape: f32[16,128], index: 1, kind: input, shape index: {}]
  %s2 = inlined_call_operand.vmem [shape: f32[1,128], index: 2, kind: input, shape index: {}]
  %s3 = inlined_call_operand.vmem [shape: f32[128,16], index: 3, kind: input, shape index: {}]
  %s4 = inlined_call_operand.vmem [shape: f32[1,16], index: 4, kind: input, shape index: {}]
  %s5 = inlined_call_operand.hbm [shape: f32[2,16,256], index: 5, kind: output, shape index: {}]
  %s6 = sld [smem:[#allocation0]]
  $region53: #{tpu_custom_call.1} parent=0
    _
  %s8 = ssub.s32 1, %s6
  %s9 = scalar_select 0, %s8, %s6
  $region1: #{tpu_custom_call.1} parent=0
    #allocation2 [shape = 'u8[32768]{0}', space=vmem, size = 0x8000, scoped, tag = 'output window, operand 0']
    #allocation3 [shape = 's32[2]{0}', space=sflag, size = 0x8, scoped, tag = 'scoped memory for tpu_custom_call.1']
    %10 = vsyncpa [#allocation3], 0
    %s11 = scalar_lea.sflag [#allocation3], 1
    %12 = vsyncpa %s11, 0
    loop: start=0, step=1, limit=4
    $region2: #{tpu_custom_call.1} parent=1 // loop_pre_header
      _
    $region3: #{tpu_custom_call.1} parent=1 // loop_header
      %s14 = sphi 0, %s18
      %p15 = scmp.ge.s32.totalorder %s14, 4
      %s24 = sphi 0, %s26
      %s27 = sphi 0, %s24
      %s28 = sphi 0, %s27
      %s44 = sphi 0, %s28
      %s48 = sphi 0, %s48
      %s50 = sphi 0, %s48
      %s51 = sphi 0, %s50
      %s65 = sphi 0, %s51
      %s69 = sphi 0, %s69
      %s71 = sphi 0, %s69
      %s72 = sphi 0, %s71
      %s86 = sphi 0, %s72
      %s90 = sphi 0, %s90
      %s92 = sphi 0, %s90
      %s93 = sphi 0, %s92
      %s107 = sphi 0, %s93
      %s111 = sphi 0, %s111
      %s113 = sphi 0, %s111
      %s114 = sphi 0, %s113
      %s128 = sphi 0, %s114
      %s134 = sphi 0, %s136
      %s137 = sphi 0, %s134
      %s138 = sphi 0, %s137
      %s154 = sphi 0, %s138
    $region4: #{tpu_custom_call.1} parent=1 // loop_header_branch
      %17 = sbr.rel (%p15) target = $region8
    $region5: #{tpu_custom_call.1} parent=1 // loop_body
      %s19 = ssub.s32 %s14, 1
      %s20 = ssub.s32 %s14, 2
      %s21 = sadd.s32 %s14, 1
      %s22 = ssub.s32 %s14, %s21
      %p23 = scmp.eq.s32.totalorder %s22, 0
      %s25 = sadd.s32 %s24, 1
      %s26 = scalar_select %p23, %s24, %s25
      %p29 = pneg %p23
      %p30 = scmp.eq.s32.totalorder %s14, 1
      %p31 = por %p29, %p30
      %p32 = scmp.ne.s32.totalorder %s24, %s27
      %p33 = scmp.eq.s32.totalorder %s14, 0
      %p34 = por %p32, %p33
      %p35 = scmp.ne.s32.totalorder %s24, %s27
      %p36 = scmp.eq.s32.totalorder %s19, 1
      %p37 = por %p35, %p36
      %p38 = scmp.ne.s32.totalorder %s27, %s28
      %p39 = scmp.eq.s32.totalorder %s19, 0
      %p40 = por %p38, %p39
      %p41 = scmp.ne.s32.totalorder %s27, %s28
      %p42 = scmp.eq.s32.totalorder %s20, 1
      %p43 = por %p41, %p42
      %p45 = scmp.ne.s32.totalorder %s28, %s44
      %p46 = scmp.eq.s32.totalorder %s20, 0
      %p47 = por %p45, %p46
      %s49 = sadd.s32 %s48, 1
      %p52 = scmp.eq.s32.totalorder %s14, 1
      %p53 = scmp.ne.s32.totalorder %s48, %s50
      %p54 = scmp.eq.s32.totalorder %s14, 0
      %p55 = por %p53, %p54
      %p56 = scmp.ne.s32.totalorder %s48, %s50
      %p57 = scmp.eq.s32.totalorder %s19, 1
      %p58 = por %p56, %p57
      %p59 = scmp.ne.s32.totalorder %s50, %s51
      %p60 = scmp.eq.s32.totalorder %s19, 0
      %p61 = por %p59, %p60
      %p62 = scmp.ne.s32.totalorder %s50, %s51
      %p63 = scmp.eq.s32.totalorder %s20, 1
      %p64 = por %p62, %p63
      %p66 = scmp.ne.s32.totalorder %s51, %s65
      %p67 = scmp.eq.s32.totalorder %s20, 0
      %p68 = por %p66, %p67
      %s70 = sadd.s32 %s69, 1
      %p73 = scmp.eq.s32.totalorder %s14, 1
      %p74 = scmp.ne.s32.totalorder %s69, %s71
      %p75 = scmp.eq.s32.totalorder %s14, 0
      %p76 = por %p74, %p75
      %p77 = scmp.ne.s32.totalorder %s69, %s71
      %p78 = scmp.eq.s32.totalorder %s19, 1
      %p79 = por %p77, %p78
      %p80 = scmp.ne.s32.totalorder %s71, %s72
      %p81 = scmp.eq.s32.totalorder %s19, 0
      %p82 = por %p80, %p81
      %p83 = scmp.ne.s32.totalorder %s71, %s72
      %p84 = scmp.eq.s32.totalorder %s20, 1
      %p85 = por %p83, %p84
      %p87 = scmp.ne.s32.totalorder %s72, %s86
      %p88 = scmp.eq.s32.totalorder %s20, 0
      %p89 = por %p87, %p88
      %s91 = sadd.s32 %s90, 1
      %p94 = scmp.eq.s32.totalorder %s14, 1
      %p95 = scmp.ne.s32.totalorder %s90, %s92
      %p96 = scmp.eq.s32.totalorder %s14, 0
      %p97 = por %p95, %p96
      %p98 = scmp.ne.s32.totalorder %s90, %s92
      %p99 = scmp.eq.s32.totalorder %s19, 1
      %p100 = por %p98, %p99
      %p101 = scmp.ne.s32.totalorder %s92, %s93
      %p102 = scmp.eq.s32.totalorder %s19, 0
      %p103 = por %p101, %p102
      %p104 = scmp.ne.s32.totalorder %s92, %s93
      %p105 = scmp.eq.s32.totalorder %s20, 1
      %p106 = por %p104, %p105
      %p108 = scmp.ne.s32.totalorder %s93, %s107
      %p109 = scmp.eq.s32.totalorder %s20, 0
      %p110 = por %p108, %p109
      %s112 = sadd.s32 %s111, 1
      %p115 = scmp.eq.s32.totalorder %s14, 1
      %p116 = scmp.ne.s32.totalorder %s111, %s113
      %p117 = scmp.eq.s32.totalorder %s14, 0
      %p118 = por %p116, %p117
      %p119 = scmp.ne.s32.totalorder %s111, %s113
      %p120 = scmp.eq.s32.totalorder %s19, 1
      %p121 = por %p119, %p120
      %p122 = scmp.ne.s32.totalorder %s113, %s114
      %p123 = scmp.eq.s32.totalorder %s19, 0
      %p124 = por %p122, %p123
      %p125 = scmp.ne.s32.totalorder %s113, %s114
      %p126 = scmp.eq.s32.totalorder %s20, 1
      %p127 = por %p125, %p126
      %p129 = scmp.ne.s32.totalorder %s114, %s128
      %p130 = scmp.eq.s32.totalorder %s20, 0
      %p131 = por %p129, %p130
      %s132 = ssub.s32 %s14, %s21
      %p133 = scmp.eq.s32.totalorder %s132, 0
      %s135 = sadd.s32 %s134, 1
      %s136 = scalar_select %p133, %s134, %s135
      %p139 = pneg %p133
      %p140 = scmp.eq.s32.totalorder %s14, 1
      %p141 = por %p139, %p140
      %p142 = scmp.ne.s32.totalorder %s134, %s137
      %p143 = scmp.eq.s32.totalorder %s14, 0
      %p144 = por %p142, %p143
      %p145 = scmp.ne.s32.totalorder %s134, %s137
      %p146 = scmp.eq.s32.totalorder %s19, 1
      %p147 = por %p145, %p146
      %p148 = scmp.ne.s32.totalorder %s137, %s138
      %p149 = scmp.eq.s32.totalorder %s19, 0
      %p150 = por %p148, %p149
      %p151 = scmp.ne.s32.totalorder %s137, %s138
      %p152 = scmp.eq.s32.totalorder %s20, 1
      %p153 = por %p151, %p152
      %p155 = scmp.ne.s32.totalorder %s138, %s154
      %p156 = scmp.eq.s32.totalorder %s20, 0
      %p157 = por %p155, %p156
      %p158 = scmp.le.s32.totalorder 1, %s14
      %p159 = scmp.lt.s32.totalorder %s14, 3
      %p160 = pnand %p158, %p159
      %p161 = pneg %p160
      // Predicated region
      $region9: #{tpu_custom_call.1} parent=5 // pred_check
        _
      $region10: #{tpu_custom_call.1} parent=5 // pred_check_branch
        %163 = sbr.rel (%p160) target = $region12
      $region11: #{tpu_custom_call.1} parent=5 // pred_region
        %s164 = ssub.s32 %s14, 1
        // Predicated region
        $region13: #{tpu_custom_call.1} parent=11 // pred_check
          %p165 = pneg %p61
        $region14: #{tpu_custom_call.1} parent=11 // pred_check_branch
          %167 = sbr.rel (%p165) target = $region16
        $region15: #{tpu_custom_call.1} parent=11 // pred_region
          _
        $region16: #{tpu_custom_call.1} parent=11 // pred_fallthru
          _
        // Predicated region
        $region17: #{tpu_custom_call.1} parent=11 // pred_check
          %p168 = pneg %p82
        $region18: #{tpu_custom_call.1} parent=11 // pred_check_branch
          %170 = sbr.rel (%p168) target = $region20
        $region19: #{tpu_custom_call.1} parent=11 // pred_region
          _
        $region20: #{tpu_custom_call.1} parent=11 // pred_fallthru
          _
        // Predicated region
        $region21: #{tpu_custom_call.1} parent=11 // pred_check
          %p171 = pneg %p103
        $region22: #{tpu_custom_call.1} parent=11 // pred_check_branch
          %173 = sbr.rel (%p171) target = $region24
        $region23: #{tpu_custom_call.1} parent=11 // pred_region
          _
        $region24: #{tpu_custom_call.1} parent=11 // pred_fallthru
          _
        // Predicated region
        $region25: #{tpu_custom_call.1} parent=11 // pred_check
          %p174 = pneg %p124
        $region26: #{tpu_custom_call.1} parent=11 // pred_check_branch
          %176 = sbr.rel (%p174) target = $region28
        $region27: #{tpu_custom_call.1} parent=11 // pred_region
          _
        $region28: #{tpu_custom_call.1} parent=11 // pred_fallthru
          _
      $region12: #{tpu_custom_call.1} parent=5 // pred_fallthru
        _
      %p177 = scmp.lt.s32.totalorder %s14, 2
      // Predicated region
      $region29: #{tpu_custom_call.1} parent=5 // pred_check
        %p178 = pneg %p177
      $region30: #{tpu_custom_call.1} parent=5 // pred_check_branch
        %180 = sbr.rel (%p178) target = $region32
      $region31: #{tpu_custom_call.1} parent=5 // pred_region
        // Predicated region
        $region33: #{tpu_custom_call.1} parent=31 // pred_check
          %p181 = pneg %p34
        $region34: #{tpu_custom_call.1} parent=31 // pred_check_branch
          %183 = sbr.rel (%p181) target = $region36
        $region35: #{tpu_custom_call.1} parent=31 // pred_region
          %p184 = scmp.lt.s32.totalorder %s14, 1
          %s185 = scalar_select %p184, %s14, 1
          %s186 = smul.addr %s185, 4
          %s187 = smul.addr %s186, 8
          %s188 = scalar_lea.vmem %s0, %s187
        $region36: #{tpu_custom_call.1} parent=31 // pred_fallthru
          _
      $region32: #{tpu_custom_call.1} parent=5 // pred_fallthru
        _
      %p189 = scmp.le.s32.totalorder 1, %s14
      %p190 = scmp.lt.s32.totalorder %s14, 3
      %p191 = pnand %p189, %p190
      %p192 = pneg %p191
      // Predicated region
      $region37: #{tpu_custom_call.1} parent=5 // pred_check
        _
      $region38: #{tpu_custom_call.1} parent=5 // pred_check_branch
        %194 = sbr.rel (%p191) target = $region40
      $region39: #{tpu_custom_call.1} parent=5 // pred_region
        %s195 = ssub.s32 %s14, 1
        %p196 = scmp.lt.s32.totalorder %s19, 1
        %s197 = scalar_select %p196, %s19, 1
        %s198 = smul.addr %s197, 4
        %s199 = smul.addr %s198, 8
        %s200 = scalar_lea.vmem %s0, %s199
        %p201 = pneg %p40
        %p202 = pneg %p37
        %p203 = pneg %p61
        %p204 = pneg %p58
        %p205 = pneg %p82
        %p206 = pneg %p79
        %p207 = pneg %p103
        %p208 = pneg %p100
        %p209 = pneg %p124
        %p210 = pneg %p121
        %p211 = pneg %p150
        %p212 = pneg %p147
        %s213 = sand.u32 %s137, 1
        %s214 = scalar_lea.sflag [#allocation3], %s213
        %s215 = sand.u32 %s137, 1
        %s216 = smul.addr %s215, 32
        %s217 = scalar_lea.vmem [#allocation2], %s216
        %p218 = scmp.lt.s32.totalorder %s19, 1
        %s219 = scalar_select %p218, %s19, 1
        %s220 = smul.addr %s219, 4
        %s221 = smul.addr %s220, 8
        %s222 = scalar_lea.vmem %s0, %s221
        %v223 = vld [vmem:[%s222] sm:$0xff]
        %v224 = vld [vmem:[%s222 + $0x8] sm:$0xff]
        %v225 = vld [vmem:[%s222 + $0x10] sm:$0xff]
        %v226 = vld [vmem:[%s222 + $0x18] sm:$0xff]
        %v227 = vadd.f32 %v223, %v224
        %228 = vadd.xlane.f32.xlu0 %v227
        %v229 = vpop.xlane.xlu0 %228
        %v230 = vadd.f32 %v225, %v226
        %231 = vadd.xlane.f32.xlu0 %v230
        %v232 = vpop.xlane.xlu0 %231
        %v233 = vmul.f32 %v229, 0.00390625
        %v234 = vmul.f32 %v232, 0.00390625
        %v235 = vld [vmem:[%s1] sm:$0xff]
        %v236 = vld [vmem:[%s1 + $0x8] sm:$0xff]
        %v237 = vld [vmem:[%s2] sm:$0x1]
        %v240 = vlaneseq
        %v241 = vand.u32 %v240, 127
        %v242 = vperm.slane %v233, %v241
        %v243 = vadd.s32 %v241, 4294967288
        %v244 = vperm.slane %v234, %v243
        %vm245 = vcmask 130112
        %v246 = vsel %vm245, %v244, %v242
        %vm247 = vcmask 130048
        %v248 = vsel %vm247, %v246, 0
        %250 = vmatpush.msra.mxu0 0.0
        %251 = vmatpush.msra.mxu0 0.0
        %252 = vmatpush.msra.mxu0 0.0
        %253 = vmatpush.msra.mxu0 0.0
        %254 = vmatpush.msra.mxu0 0.0
        %255 = vmatpush.msra.mxu0 0.0
        %256 = vmatpush.msra.mxu0 0.0
        %257 = vmatpush.msra.mxu0 0.0
        %258 = vmatpush.msra.mxu0 0.0
        %259 = vmatpush.msra.mxu0 0.0
        %260 = vmatpush.msra.mxu0 0.0
        %261 = vmatpush.msra.mxu0 0.0
        %262 = vmatpush.msra.mxu0 0.0
        %263 = vmatpush.msra.mxu0 0.0
        %264 = vmatpush.msra.mxu0 %v236
        %265 = vmatpush.msra.mxu0 %v235
        %266 = vmatmul.f32.gmra.mxu0 %v248
        %v267 = vpop.f32.mrf.mxu0
        %v268 = vadd.f32 %v237, %v267
        %269 = vdwg.mxu0
        %v270 = vmax.f32 %v268, 0.0
        %v271 = vld [vmem:[%s3] sm:$0xff]
        %v272 = vld [vmem:[%s3 + $0x8] sm:$0xff]
        %v273 = vld [vmem:[%s3 + $0x10] sm:$0xff]
        %v274 = vld [vmem:[%s3 + $0x18] sm:$0xff]
        %v275 = vld [vmem:[%s3 + $0x20] sm:$0xff]
        %v276 = vld [vmem:[%s3 + $0x28] sm:$0xff]
        %v277 = vld [vmem:[%s3 + $0x30] sm:$0xff]
        %v278 = vld [vmem:[%s3 + $0x38] sm:$0xff]
        %v279 = vld [vmem:[%s3 + $0x40] sm:$0xff]
        %v280 = vld [vmem:[%s3 + $0x48] sm:$0xff]
        %v281 = vld [vmem:[%s3 + $0x50] sm:$0xff]
        %v282 = vld [vmem:[%s3 + $0x58] sm:$0xff]
        %v283 = vld [vmem:[%s3 + $0x60] sm:$0xff]
        %v284 = vld [vmem:[%s3 + $0x68] sm:$0xff]
        %v285 = vld [vmem:[%s3 + $0x70] sm:$0xff]
        %v286 = vld [vmem:[%s3 + $0x78] sm:$0xff]
        %v287 = vld [vmem:[%s4] sm:$0x1]
        %288 = vmatpush.msra.mxu0 %v286
        %289 = vmatpush.msra.mxu0 %v285
        %290 = vmatpush.msra.mxu0 %v284
        %291 = vmatpush.msra.mxu0 %v283
        %292 = vmatpush.msra.mxu0 %v282
        %293 = vmatpush.msra.mxu0 %v281
        %294 = vmatpush.msra.mxu0 %v280
        %295 = vmatpush.msra.mxu0 %v279
        %296 = vmatpush.msra.mxu0 %v278
        %297 = vmatpush.msra.mxu0 %v277
        %298 = vmatpush.msra.mxu0 %v276
        %299 = vmatpush.msra.mxu0 %v275
        %300 = vmatpush.msra.mxu0 %v274
        %301 = vmatpush.msra.mxu0 %v273
        %302 = vmatpush.msra.mxu0 %v272
        %303 = vmatpush.msra.mxu0 %v271
        %304 = vmatmul.f32.gmra.mxu0 %v270
        %v305 = vpop.f32.mrf.mxu0
        %v306 = vadd.f32 %v287, %v305
        %307 = vdwg.mxu0
        %v308 = vadd.f32 %v306, 3.0
        %v309 = vmax.f32 %v308, 0.0
        %v310 = vmin.f32 %v309, 6.0
        %v311 = vmul.f32 %v310, 0.16666667
        %v312 = vperm.slane %v311, 0
        %v313 = vlaneseq
        %v314 = vshrl.u32 %v313, 7
        %316 = vset.pattern.permute.xlu0 %v314
        %317 = vperm.xlu0 %316, %v312
        %v318 = vpop.permute.xlu0 %317
        %v319 = vlaneseq
        %v320 = vshrl.u32 %v319, 7
        %v321 = vadd.s32 %v320, 8
        %322 = vset.pattern.permute.xlu0 %v321
        %323 = vperm.xlu0 %322, %v312
        %v324 = vpop.permute.xlu0 %323
        %v325 = vmul.f32 %v223, %v318
        %v326 = vmul.f32 %v224, %v318
        %v327 = vmul.f32 %v225, %v324
        %v328 = vmul.f32 %v226, %v324
        %329 = vst [vmem:[%s217] sm:$0xff] %v325
        %330 = vst [vmem:[%s217 + $0x8] sm:$0xff] %v326
        %331 = vst [vmem:[%s217 + $0x10] sm:$0xff] %v327
        %332 = vst [vmem:[%s217 + $0x18] sm:$0xff] %v328
        %s333 = sand.u32 %s137, 1
        %s334 = scalar_lea.sflag [#allocation3], %s333
        %s335 = sand.u32 %s137, 1
        %s336 = smul.addr %s335, 32
        %s337 = scalar_lea.vmem [#allocation2], %s336
        // Predicated region
        $region41: #{tpu_custom_call.1} parent=39 // pred_check
          %p338 = pneg %p147
        $region42: #{tpu_custom_call.1} parent=39 // pred_check_branch
          %340 = sbr.rel (%p338) target = $region44
        $region43: #{tpu_custom_call.1} parent=39 // pred_region
          %342 = vsyncadd %s334, 0
          %s343 = smul.addr %s19, 4
          %s344 = smul.addr %s343, 8
          %s345 = scalar_lea.hbm %s5, %s344
          %s346 = sshll.u32 %s337, 4
          %s347 = int_to_ptr.vmem [resolvable:$true] %s346
          %s348 = sshll.u32 %s345, 4
          %s349 = int_to_ptr.hbm [resolvable:$true] %s348
          %354 = dma.vmem_to_hbm [thread:$0]  %s347, 512, %s349, %s334, 256, 256, 16
        $region44: #{tpu_custom_call.1} parent=39 // pred_fallthru
          _
      $region40: #{tpu_custom_call.1} parent=5 // pred_fallthru
        _
      %p355 = scmp.le.s32.totalorder 2, %s14
      // Predicated region
      $region45: #{tpu_custom_call.1} parent=5 // pred_check
        %p356 = pneg %p355
      $region46: #{tpu_custom_call.1} parent=5 // pred_check_branch
        %358 = sbr.rel (%p356) target = $region48
      $region47: #{tpu_custom_call.1} parent=5 // pred_region
        %s359 = ssub.s32 %s14, 2
        // Predicated region
        $region49: #{tpu_custom_call.1} parent=47 // pred_check
          %p360 = pneg %p153
        $region50: #{tpu_custom_call.1} parent=47 // pred_check_branch
          %362 = sbr.rel (%p360) target = $region52
        $region51: #{tpu_custom_call.1} parent=47 // pred_region
          %s363 = sand.u32 %s138, 1
          %s364 = scalar_lea.sflag [#allocation3], %s363
          %s365 = sand.u32 %s138, 1
          %s366 = smul.addr %s365, 32
          %s367 = scalar_lea.vmem [#allocation2], %s366
          %369 = dma.done %s364, 512
        $region52: #{tpu_custom_call.1} parent=47 // pred_fallthru
          _
      $region48: #{tpu_custom_call.1} parent=5 // pred_fallthru
        _
    $region6: #{tpu_custom_call.1} parent=1 // loop_footer
      %s18 = sadd.s32 1, %s14
    $region7: #{tpu_custom_call.1} parent=1 // loop_footer_branch
      %13 = sbr.rel target = $region3
    $region8: #{tpu_custom_call.1} parent=1 // loop_exit
      _
    %370 = vsyncpa [#allocation3], 1
    %s371 = scalar_lea.sflag [#allocation3], 1
    %372 = vsyncpa %s371, 1

</llo_original>
